<compile_context>
chip_gen: v5e
topology: v5e:2x2
jax: 0.10.0
libtpu: 0.0.40
codegen_flags: <defaults>
</compile_context>

<pallas_src>
import functools

import jax
import jax.numpy as jnp
from jax.experimental import pallas as pl
from jax.experimental.pallas import tpu as pltpu

EPS = 1e-5  # PyTorch BatchNorm1d default


def _round_up(v, m):
    return (v + m - 1) // m * m


def _sublane_multiple(dtype):
    # 8 rows for 4-byte dtypes, 16 for bf16/fp16, 32 for int8/fp8.
    return max(8, 32 // jnp.dtype(dtype).itemsize)


def _vmem_limit_bytes():
    # Generation-aware scoped-VMEM limit: ~100 MiB on 128 MiB chips (v5e/v6e),
    # ~54 MiB on v7x (64 MiB physical).
    try:
        cap = pltpu.get_tpu_info().vmem_capacity_bytes
    except Exception:  # pragma: no cover - conservative fallback
        cap = 64 * 1024 * 1024
    return int(min(100 * 1024 * 1024, cap * 0.85))


def _pad2d(a, rows, cols):
    r, c = a.shape
    if r == rows and c == cols:          # skip the extra HBM copy when aligned
        return a
    return jnp.pad(a, ((0, rows - r), (0, cols - c)))


# ---------------------------------------------------------------------------
# Pass 1: h = x @ W1 per batch tile + per-tile partial BatchNorm statistics.
# Batch axis is fully parallel; the tiny global fold is done in the wrapper.
# ---------------------------------------------------------------------------
def _stage1_kernel(x_ref, w1_ref, h_ref, stats_ref):
    # Linear 1 (bias-free because BN follows). W1 is pre-transposed to (in, out)
    # in the wrapper; inputs stay in the compute dtype, accumulation is f32.
    h = jnp.dot(x_ref[...], w1_ref[...], preferred_element_type=jnp.float32)

    # Partial BN stats taken from the f32 accumulator (before any narrowing cast).
    # NOTE: global var is later formed as E[h^2]-E[h]^2 (clamped >= 0); this can
    # cancel if |mean| >> std — acceptable for normalized projection-head inputs.
    s = jnp.sum(h, axis=0, keepdims=True)        # (1, d_hid_p)
    q = jnp.sum(h * h, axis=0, keepdims=True)    # (1, d_hid_p)
    pad = jnp.zeros((6, s.shape[1]), jnp.float32)
    stats_ref[...] = jnp.concatenate([s, q, pad], axis=0)   # (8, d_hid_p) block

    # Store h in the (narrow) compute dtype: halves the dominant inter-pass
    # HBM traffic and the h-tile VMEM footprint.
    h_ref[...] = h.astype(h_ref.dtype)


# ---------------------------------------------------------------------------
# Pass 2: folded BN affine + ReLU + Linear 2 per batch tile (parallel).
# ---------------------------------------------------------------------------
def _stage2_kernel(h_ref, scale_ref, shift_ref, w2_ref, b2_ref, o_ref):
    a = jnp.maximum(
        h_ref[...].astype(jnp.float32) * scale_ref[...] + shift_ref[...], 0.0)
    out = jnp.dot(a.astype(w2_ref.dtype), w2_ref[...],
                  preferred_element_type=jnp.float32)
    o_ref[...] = (out + b2_ref[...]).astype(o_ref.dtype)


# ---------------------------------------------------------------------------
# Wrapper: layout plumbing (transpose / cast / pad) + two pallas_calls + fold.
# ---------------------------------------------------------------------------
def projection_head(x, w1, gamma, beta, w2, b2, *, batch_tile=512,
                    compute_dtype=jnp.bfloat16):
    """Forward pass of ProjectionHead([Linear->BN->ReLU, Linear])."""
    if compute_dtype is None:
        compute_dtype = x.dtype
    cdt = jnp.dtype(compute_dtype)
    out_dt = x.dtype

    B, d_in = x.shape
    d_hid = w1.shape[0]
    d_out = w2.shape[0]

    # Lane-dense feature padding (multiples of 128); dtype-native sublane tile.
    d_in_p = _round_up(d_in, 128)
    d_hid_p = _round_up(d_hid, 128)
    d_out_p = _round_up(d_out, 128)
    sub = _sublane_multiple(cdt)
    tb = min(_round_up(batch_tile, sub), _round_up(B, sub))
    b_p = _round_up(B, tb)
    nbt = b_p // tb

    # One-time layout plumbing (no-ops when already aligned / already in cdt):
    # pre-transpose weights to (in, out), cast to the compute dtype, zero-pad.
    x_p = _pad2d(x.astype(cdt), b_p, d_in_p)
    w1_t = _pad2d(w1.T.astype(cdt), d_in_p, d_hid_p)
    w2_t = _pad2d(w2.T.astype(cdt), d_hid_p, d_out_p)
    gamma_p = _pad2d(gamma.reshape(1, -1).astype(jnp.float32), 1, d_hid_p)
    beta_p = _pad2d(beta.reshape(1, -1).astype(jnp.float32), 1, d_hid_p)
    b2_p = _pad2d(b2.reshape(1, -1).astype(jnp.float32), 1, d_out_p)

    cparams = pltpu.CompilerParams(
        dimension_semantics=("parallel",),            # megacore-shardable (v7x)
        vmem_limit_bytes=_vmem_limit_bytes())

    def run(single_buffer):
        def inv(shape):
            # Loop-invariant block (constant index_map): single-buffer it so a
            # big weight block is not held twice in VMEM.
            idx = lambda i, _s=shape: (0,) * len(_s)
            if single_buffer:
                return pl.BlockSpec(shape, idx, pipeline_mode=pl.Buffered(1))
            return pl.BlockSpec(shape, idx)

        h, stats = pl.pallas_call(
            _stage1_kernel,
            out_shape=(jax.ShapeDtypeStruct((b_p, d_hid_p), cdt),
                       jax.ShapeDtypeStruct((nbt * 8, d_hid_p), jnp.float32)),
            grid_spec=pltpu.PrefetchScalarGridSpec(
                num_scalar_prefetch=0,
                grid=(nbt,),
                in_specs=[pl.BlockSpec((tb, d_in_p), lambda i: (i, 0)),
                          inv((d_in_p, d_hid_p))],
                out_specs=[pl.BlockSpec((tb, d_hid_p), lambda i: (i, 0)),
                           pl.BlockSpec((8, d_hid_p), lambda i: (i, 0))]),
            compiler_params=cparams,
        )(x_p, w1_t)

        # Tiny global fold: per-tile partial sums -> BN scale/shift (plain jnp).
        stats = stats.reshape(nbt, 8, d_hid_p)
        sums = stats[:, 0, :].sum(axis=0)             # (d_hid_p,)
        sqs = stats[:, 1, :].sum(axis=0)
        mean = sums / B                                # padded rows are zero
        var = jnp.maximum(sqs / B - mean * mean, 0.0)  # biased var, clamped
        inv_std = jax.lax.rsqrt(var + EPS)
        scale_v = gamma_p[0] * inv_std                 # padded features -> 0
        shift_v = beta_p[0] - mean * scale_v
        scale = scale_v.reshape(1, d_hid_p)
        shift = shift_v.reshape(1, d_hid_p)

        out_p = pl.pallas_call(
            _stage2_kernel,
            out_shape=jax.ShapeDtypeStruct((b_p, d_out_p), out_dt),
            grid_spec=pltpu.PrefetchScalarGridSpec(
                num_scalar_prefetch=0,
                grid=(nbt,),
                in_specs=[pl.BlockSpec((tb, d_hid_p), lambda i: (i, 0)),
                          inv((1, d_hid_p)),
                          inv((1, d_hid_p)),
                          inv((d_hid_p, d_out_p)),
                          inv((1, d_out_p))],
                out_specs=pl.BlockSpec((tb, d_out_p), lambda i: (i, 0))),
            compiler_params=cparams,
        )(h, scale, shift, w2_t, b2_p)
        return out_p

    try:
        out_p = run(single_buffer=True)
    except Exception:
        # pl.Buffered(1) (single-buffered invariant operands) not supported on
        # this JAX/Mosaic version -> fall back to default double buffering.
        out_p = run(single_buffer=False)

    if b_p == B and d_out_p == d_out:
        return out_p
    return out_p[:B, :d_out]


def reference(x, w1, gamma, beta, w2, b2):
    h = x @ w1.T
    mean = jnp.mean(h, axis=0, keepdims=True)
    var = jnp.mean((h - mean) ** 2, axis=0, keepdims=True)
    h = (h - mean) / jnp.sqrt(var + EPS) * gamma.reshape(1, -1) + beta.reshape(1, -1)
    a = jnp.maximum(h, 0.0)
    return a @ w2.T + b2.reshape(1, -1)


if __name__ == "__main__":
    B, d_in, d_hid, d_out = 8, 32, 64, 32

    key = jax.random.PRNGKey(0)
    kx, k1, k2, k3 = jax.random.split(key, 4)

    x = jax.random.normal(kx, (B, d_in), dtype=jnp.float32)

    # Deterministic PyTorch-style Linear init: U(-1/sqrt(fan_in), 1/sqrt(fan_in)).
    b1_bound = 1.0 / jnp.sqrt(jnp.float32(d_in))
    w1 = jax.random.uniform(k1, (d_hid, d_in), jnp.float32, -b1_bound, b1_bound)
    gamma = jnp.ones((d_hid,), jnp.float32)   # BatchNorm1d weight
    beta = jnp.zeros((d_hid,), jnp.float32)   # BatchNorm1d bias

    b2_bound = 1.0 / jnp.sqrt(jnp.float32(d_hid))
    w2 = jax.random.uniform(k2, (d_out, d_hid), jnp.float32, -b2_bound, b2_bound)
    b2 = jax.random.uniform(k3, (d_out,), jnp.float32, -b2_bound, b2_bound)

    ref = reference(x, w1, gamma, beta, w2, b2)

    # Fast path (default): bf16 compute, f32 MXU accumulation + f32 BN stats.
    out_fast = jax.block_until_ready(projection_head(x, w1, gamma, beta, w2, b2))
    assert out_fast.shape == (B, d_out)
    assert out_fast.dtype == x.dtype
    assert jnp.allclose(out_fast, ref, atol=8e-2, rtol=8e-2), "bf16 path mismatch"

    # Exact path: keep the caller's f32 end-to-end.
    out_f32 = jax.block_until_ready(
        projection_head(x, w1, gamma, beta, w2, b2, compute_dtype=jnp.float32))
    assert jnp.allclose(out_f32, ref, atol=1e-4, rtol=1e-4), "f32 path mismatch"

    print("KERNEL_OK")
</pallas_src>

<mosaic_0001>
module attributes {stable_mosaic.version = 11 : i64} {
  func.func @_stage1_kernel(%arg0: i32, %arg1: memref<16x128xbf16, #tpu.memory_space<vmem>>, %arg2: memref<128x128xbf16, #tpu.memory_space<vmem>>, %arg3: memref<16x128xbf16, #tpu.memory_space<vmem>>, %arg4: memref<8x128xf32, #tpu.memory_space<vmem>>) attributes {dimension_semantics = [#tpu.dimension_semantics<parallel>], iteration_bounds = array<i64: 1>, scalar_prefetch = 0 : i64, scratch_operands = 0 : i64, tpu.core_type = #tpu.core_type<tc>, window_params = [{transform_indices = @transform_0, window_bounds = array<i64: 16, 128>}, {pipeline_mode = #tpu.pipeline_mode<synchronous>, transform_indices = @transform_1, window_bounds = array<i64: 128, 128>}, {transform_indices = @transform_2, window_bounds = array<i64: 16, 128>}, {transform_indices = @transform_3, window_bounds = array<i64: 8, 128>}]} {
    %c0 = arith.constant 0 : index
    %c0_0 = arith.constant 0 : index
    %0 = vector.load %arg1[%c0, %c0_0] : memref<16x128xbf16, #tpu.memory_space<vmem>>, vector<16x128xbf16>
    %c0_1 = arith.constant 0 : index
    %c0_2 = arith.constant 0 : index
    %1 = vector.load %arg2[%c0_1, %c0_2] : memref<128x128xbf16, #tpu.memory_space<vmem>>, vector<128x128xbf16>
    %cst = arith.constant dense<0.000000e+00> : vector<16x128xf32>
    %2 = tpu.matmul %0, %1, %cst {dimension_numbers = #tpu.dot_dimension_numbers<[1], [0], [0], [1], [0, 0, 1, 1], [], []>} : vector<16x128xbf16>, vector<128x128xbf16>, vector<16x128xf32> -> vector<16x128xf32>
    %cst_3 = arith.constant dense<0.000000e+00> : vector<128xf32>
    %3 = vector.multi_reduction <add>, %2, %cst_3 [0] : vector<16x128xf32> to vector<128xf32>
    %4 = vector.shape_cast %3 : vector<128xf32> to vector<1x128xf32>
    %5 = arith.mulf %2, %2 : vector<16x128xf32>
    %cst_4 = arith.constant dense<0.000000e+00> : vector<128xf32>
    %6 = vector.multi_reduction <add>, %5, %cst_4 [0] : vector<16x128xf32> to vector<128xf32>
    %7 = vector.shape_cast %6 : vector<128xf32> to vector<1x128xf32>
    %cst_5 = arith.constant 0.000000e+00 : f32
    %8 = vector.broadcast %cst_5 : f32 to vector<6x128xf32>
    %9 = tpu.concatenate %4, %7, %8 in 0 : vector<1x128xf32>, vector<1x128xf32>, vector<6x128xf32> -> vector<8x128xf32>
    %c0_6 = arith.constant 0 : index
    %c0_7 = arith.constant 0 : index
    %10 = vector.load %arg4[%c0_6, %c0_7] : memref<8x128xf32, #tpu.memory_space<vmem>>, vector<8x128xf32>
    tpu.vector_store %arg4[%c0_6, %c0_7], %9 {strides = array<i32>} : memref<8x128xf32, #tpu.memory_space<vmem>>, vector<8x128xf32>,
    %11 = arith.truncf %2 : vector<16x128xf32> to vector<16x128xbf16>
    %c0_8 = arith.constant 0 : index
    %c0_9 = arith.constant 0 : index
    %12 = vector.load %arg3[%c0_8, %c0_9] : memref<16x128xbf16, #tpu.memory_space<vmem>>, vector<16x128xbf16>
    tpu.vector_store %arg3[%c0_8, %c0_9], %11 {strides = array<i32>} : memref<16x128xbf16, #tpu.memory_space<vmem>>, vector<16x128xbf16>,
    return
  }
  func.func @transform_0(%arg0: i32) -> (i32, i32) {
    %c0_i32 = arith.constant 0 : i32
    %c0_i32_0 = arith.constant 0 : i32
    return %arg0, %c0_i32 : i32, i32
  }
  func.func @transform_1(%arg0: i32) -> (i32, i32) {
    %c0_i32 = arith.constant 0 : i32
    %c0_i32_0 = arith.constant 0 : i32
    %c0_i32_1 = arith.constant 0 : i32
    return %c0_i32, %c0_i32_0 : i32, i32
  }
  func.func @transform_2(%arg0: i32) -> (i32, i32) {
    %c0_i32 = arith.constant 0 : i32
    %c0_i32_0 = arith.constant 0 : i32
    return %arg0, %c0_i32 : i32, i32
  }
  func.func @transform_3(%arg0: i32) -> (i32, i32) {
    %c0_i32 = arith.constant 0 : i32
    %c0_i32_0 = arith.constant 0 : i32
    return %arg0, %c0_i32 : i32, i32
  }
}

module attributes {stable_mosaic.version = 11 : i64} {
  func.func @_stage1_kernel(%arg0: i32, %arg1: memref<16x128xbf16, #tpu.memory_space<vmem>>, %arg2: memref<128x128xbf16, #tpu.memory_space<vmem>>, %arg3: memref<16x128xbf16, #tpu.memory_space<vmem>>, %arg4: memref<8x128xf32, #tpu.memory_space<vmem>>) attributes {dimension_semantics = [#tpu.dimension_semantics<parallel>], iteration_bounds = array<i64: 1>, scalar_prefetch = 0 : i64, scratch_operands = 0 : i64, tpu.core_type = #tpu.core_type<tc>, window_params = [{transform_indices = @transform_0, window_bounds = array<i64: 16, 128>}, {pipeline_mode = #tpu.pipeline_mode<synchronous>, transform_indices = @transform_1, window_bounds = array<i64: 128, 128>}, {transform_indices = @transform_2, window_bounds = array<i64: 16, 128>}, {transform_indices = @transform_3, window_bounds = array<i64: 8, 128>}]} {
    %c0 = arith.constant 0 : index
    %c0_0 = arith.constant 0 : index
    %0 = vector.load %arg1[%c0, %c0_0] : memref<16x128xbf16, #tpu.memory_space<vmem>>, vector<16x128xbf16>
    %c0_1 = arith.constant 0 : index
    %c0_2 = arith.constant 0 : index
    %1 = vector.load %arg2[%c0_1, %c0_2] : memref<128x128xbf16, #tpu.memory_space<vmem>>, vector<128x128xbf16>
    %cst = arith.constant dense<0.000000e+00> : vector<16x128xf32>
    %2 = tpu.matmul %0, %1, %cst {dimension_numbers = #tpu.dot_dimension_numbers<[1], [0], [0], [1], [0, 0, 1, 1], [], []>} : vector<16x128xbf16>, vector<128x128xbf16>, vector<16x128xf32> -> vector<16x128xf32>
    %cst_3 = arith.constant dense<0.000000e+00> : vector<128xf32>
    %3 = vector.multi_reduction <add>, %2, %cst_3 [0] : vector<16x128xf32> to vector<128xf32>
    %4 = vector.shape_cast %3 : vector<128xf32> to vector<1x128xf32>
    %5 = arith.mulf %2, %2 : vector<16x128xf32>
    %cst_4 = arith.constant dense<0.000000e+00> : vector<128xf32>
    %6 = vector.multi_reduction <add>, %5, %cst_4 [0] : vector<16x128xf32> to vector<128xf32>
    %7 = vector.shape_cast %6 : vector<128xf32> to vector<1x128xf32>
    %cst_5 = arith.constant 0.000000e+00 : f32
    %8 = vector.broadcast %cst_5 : f32 to vector<6x128xf32>
    %9 = tpu.concatenate %4, %7, %8 in 0 : vector<1x128xf32>, vector<1x128xf32>, vector<6x128xf32> -> vector<8x128xf32>
    %c0_6 = arith.constant 0 : index
    %c0_7 = arith.constant 0 : index
    %10 = vector.load %arg4[%c0_6, %c0_7] : memref<8x128xf32, #tpu.memory_space<vmem>>, vector<8x128xf32>
    tpu.vector_store %arg4[%c0_6, %c0_7], %9 {strides = array<i32>} : memref<8x128xf32, #tpu.memory_space<vmem>>, vector<8x128xf32>,
    %11 = arith.truncf %2 : vector<16x128xf32> to vector<16x128xbf16>
    %c0_8 = arith.constant 0 : index
    %c0_9 = arith.constant 0 : index
    %12 = vector.load %arg3[%c0_8, %c0_9] : memref<16x128xbf16, #tpu.memory_space<vmem>>, vector<16x128xbf16>
    tpu.vector_store %arg3[%c0_8, %c0_9], %11 {strides = array<i32>} : memref<16x128xbf16, #tpu.memory_space<vmem>>, vector<16x128xbf16>,
    return
  }
  func.func @transform_0(%arg0: i32) -> (i32, i32) {
    %c0_i32 = arith.constant 0 : i32
    %c0_i32_0 = arith.constant 0 : i32
    return %arg0, %c0_i32 : i32, i32
  }
  func.func @transform_1(%arg0: i32) -> (i32, i32) {
    %c0_i32 = arith.constant 0 : i32
    %c0_i32_0 = arith.constant 0 : i32
    %c0_i32_1 = arith.constant 0 : i32
    return %c0_i32, %c0_i32_0 : i32, i32
  }
  func.func @transform_2(%arg0: i32) -> (i32, i32) {
    %c0_i32 = arith.constant 0 : i32
    %c0_i32_0 = arith.constant 0 : i32
    return %arg0, %c0_i32 : i32, i32
  }
  func.func @transform_3(%arg0: i32) -> (i32, i32) {
    %c0_i32 = arith.constant 0 : i32
    %c0_i32_0 = arith.constant 0 : i32
    return %arg0, %c0_i32 : i32, i32
  }
}

</mosaic_0001>

<llo_original>
// kernel: tpu_custom_call.1
$region0: #{tpu_custom_call.1}
  #allocation0 [shape = 'u32[]', space=smem, size = 0x4, offset = 0x4, fixed_abs, tag = 'smem constant byte address 0x4 - core index']
  #allocation1 [shape = 'u32[72,128]{1,0:T(1,128)}', space=vmem, size = 0x9000, scoped, tag = 'internal scratch']
  %s0 = inlined_call_operand.hbm [shape: bf16[16,128], index: 0, kind: input, shape index: {}]
  %s1 = inlined_call_operand.hbm [shape: bf16[128,128], index: 1, kind: input, shape index: {}]
  %s2 = inlined_call_operand.hbm [shape: bf16[16,128], index: 2, kind: output, shape index: {0}]
  %s3 = inlined_call_operand.hbm [shape: f32[8,128], index: 3, kind: output, shape index: {1}]
  %4 = xla_tuple %s2, %s3
  %s5 = sld [smem:[#allocation0]]
  $region34: #{tpu_custom_call.1} parent=0
    _
  %s7 = ssub.s32 1, %s5
  %s8 = scalar_select 0, %s7, %s5
  $region1: #{tpu_custom_call.1} parent=0
    #allocation2 [shape = 'u8[4096]{0}', space=vmem, size = 0x1000, scoped, tag = 'input window, operand 0, single buffered']
    #allocation3 [shape = 's32[1]{0}', space=sflag, size = 0x4, scoped, tag = 'scoped memory for tpu_custom_call.1']
    #allocation4 [shape = 's32[1]{0}', space=sflag, size = 0x4, scoped, tag = 'scoped memory for tpu_custom_call.1']
    #allocation5 [shape = 'u8[32768]{0}', space=vmem, size = 0x8000, scoped, tag = 'input window, operand 1, single buffered']
    #allocation6 [shape = 's32[1]{0}', space=sflag, size = 0x4, scoped, tag = 'scoped memory for tpu_custom_call.1']
    #allocation7 [shape = 'u8[4096]{0}', space=vmem, size = 0x1000, scoped, tag = 'output window, operand 0, single buffered']
    #allocation8 [shape = 'u8[4096]{0}', space=vmem, size = 0x1000, scoped, tag = 'output window, operand 1, single buffered']
    #allocation9 [shape = 's32[1]{0}', space=sflag, size = 0x4, scoped, tag = 'scoped memory for tpu_custom_call.1']
    %9 = vsyncpa [#allocation3], 0
    %10 = vsyncpa [#allocation6], 0
    %11 = vsyncpa [#allocation4], 0
    %12 = vsyncpa [#allocation9], 0
    // Predicated region
    $region2: #{tpu_custom_call.1} parent=1 // pred_check
      _
    $region3: #{tpu_custom_call.1} parent=1 // pred_check_branch
      %14 = sbr.rel (0) target = $region5
    $region4: #{tpu_custom_call.1} parent=1 // pred_region
      %16 = vsyncadd [#allocation3], 0
      %s17 = sshll.u32 %s0, 4
      %s18 = int_to_ptr.hbm [resolvable:$true] %s17
      %s19 = sshll.u32 [#allocation2], 4
      %s20 = int_to_ptr.vmem [resolvable:$true] %s19
      %25 = dma.hbm_to_vmem [thread:$0]  %s18, 128, %s20, [#allocation3], 64, 64, 4
    $region5: #{tpu_custom_call.1} parent=1 // pred_fallthru
      _
    // Predicated region
    $region6: #{tpu_custom_call.1} parent=1 // pred_check
      _
    $region7: #{tpu_custom_call.1} parent=1 // pred_check_branch
      %27 = sbr.rel (0) target = $region9
    $region8: #{tpu_custom_call.1} parent=1 // pred_region
      %29 = vsyncadd [#allocation6], 0
      %s30 = sshll.u32 %s1, 4
      %s31 = int_to_ptr.hbm [resolvable:$true] %s30
      %s32 = sshll.u32 [#allocation5], 4
      %s33 = int_to_ptr.vmem [resolvable:$true] %s32
      %38 = dma.hbm_to_vmem [thread:$0]  %s31, 1024, %s33, [#allocation6], 64, 64, 4
    $region9: #{tpu_custom_call.1} parent=1 // pred_fallthru
      _
    // Predicated region
    $region10: #{tpu_custom_call.1} parent=1 // pred_check
      _
    $region11: #{tpu_custom_call.1} parent=1 // pred_check_branch
      %40 = sbr.rel (0) target = $region13
    $region12: #{tpu_custom_call.1} parent=1 // pred_region
      %42 = dma.done [#allocation3], 128
    $region13: #{tpu_custom_call.1} parent=1 // pred_fallthru
      _
    // Predicated region
    $region14: #{tpu_custom_call.1} parent=1 // pred_check
      _
    $region15: #{tpu_custom_call.1} parent=1 // pred_check_branch
      %44 = sbr.rel (0) target = $region17
    $region16: #{tpu_custom_call.1} parent=1 // pred_region
      %46 = dma.done [#allocation6], 1024
    $region17: #{tpu_custom_call.1} parent=1 // pred_fallthru
      _
    %v47 = vld [vmem:[#allocation2] sm:$0xf]
    %v48 = vld [vmem:[#allocation2 + $0x4] sm:$0xf]
    %v49 = vld [vmem:[#allocation5] sm:$0xf]
    %v50 = vld [vmem:[#allocation5 + $0x4] sm:$0xf]
    %v51 = vld [vmem:[#allocation5 + $0x8] sm:$0xf]
    %v52 = vld [vmem:[#allocation5 + $0xc] sm:$0xf]
    %v53 = vld [vmem:[#allocation5 + $0x10] sm:$0xf]
    %v54 = vld [vmem:[#allocation5 + $0x14] sm:$0xf]
    %v55 = vld [vmem:[#allocation5 + $0x18] sm:$0xf]
    %v56 = vld [vmem:[#allocation5 + $0x1c] sm:$0xf]
    %v57 = vld [vmem:[#allocation5 + $0x20] sm:$0xf]
    %v58 = vld [vmem:[#allocation5 + $0x24] sm:$0xf]
    %v59 = vld [vmem:[#allocation5 + $0x28] sm:$0xf]
    %v60 = vld [vmem:[#allocation5 + $0x2c] sm:$0xf]
    %v61 = vld [vmem:[#allocation5 + $0x30] sm:$0xf]
    %v62 = vld [vmem:[#allocation5 + $0x34] sm:$0xf]
    %v63 = vld [vmem:[#allocation5 + $0x38] sm:$0xf]
    %v64 = vld [vmem:[#allocation5 + $0x3c] sm:$0xf]
    %v67 = vunpack.c.l.b16 %v47
    %v68 = vunpack.c.l.b16 %v48
    %v69 = vpack.c.b16 %v68, %v67
    %v87 = vunpack.c.l.b16 %v49
    %v88 = vunpack.c.l.b16 %v50
    %v89 = vunpack.c.l.b16 %v51
    %v90 = vunpack.c.l.b16 %v52
    %v91 = vunpack.c.l.b16 %v53
    %v92 = vunpack.c.l.b16 %v54
    %v93 = vunpack.c.l.b16 %v55
    %v94 = vunpack.c.l.b16 %v56
    %v95 = vunpack.c.l.b16 %v57
    %v96 = vunpack.c.l.b16 %v58
    %v97 = vunpack.c.l.b16 %v59
    %v98 = vunpack.c.l.b16 %v60
    %v99 = vunpack.c.l.b16 %v61
    %v100 = vunpack.c.l.b16 %v62
    %v101 = vunpack.c.l.b16 %v63
    %v102 = vunpack.c.l.b16 %v64
    %v103 = vpack.c.b16 %v88, %v87
    %v104 = vpack.c.b16 %v90, %v89
    %v105 = vpack.c.b16 %v92, %v91
    %v106 = vpack.c.b16 %v94, %v93
    %v107 = vpack.c.b16 %v96, %v95
    %v108 = vpack.c.b16 %v98, %v97
    %v109 = vpack.c.b16 %v100, %v99
    %v110 = vpack.c.b16 %v102, %v101
    %119 = vmatpush.bf16.msra.mxu0 %v110
    %120 = vmatpush.bf16.msra.mxu0 %v109
    %121 = vmatpush.bf16.msra.mxu0 %v108
    %122 = vmatpush.bf16.msra.mxu0 %v107
    %123 = vmatpush.bf16.msra.mxu0 %v106
    %124 = vmatpush.bf16.msra.mxu0 %v105
    %125 = vmatpush.bf16.msra.mxu0 %v104
    %126 = vmatpush.bf16.msra.mxu0 %v103
    %127 = vmatmul.bf16.gmra.mxu0 %v69
    %v128 = vpop.f32.mrf.mxu0
    %v129 = vadd.f32 0.0, %v128
    %v130 = vpop.f32.mrf.mxu0
    %v131 = vadd.f32 0.0, %v130
    %132 = vdwg.mxu0
    %v133 = vadd.f32 %v129, %v131
    %v134 = vrot.slane %v133, 4
    %v135 = vadd.f32 %v133, %v134
    %v136 = vrot.slane %v135, 2
    %v137 = vadd.f32 %v135, %v136
    %v138 = vrot.slane %v137, 1
    %v139 = vadd.f32 %v137, %v138
    %v140 = vmul.f32 %v129, %v129
    %v141 = vmul.f32 %v131, %v131
    %v142 = vadd.f32 %v140, %v141
    %v143 = vrot.slane %v142, 4
    %v144 = vadd.f32 %v142, %v143
    %v145 = vrot.slane %v144, 2
    %v146 = vadd.f32 %v144, %v145
    %v147 = vrot.slane %v146, 1
    %v148 = vadd.f32 %v146, %v147
    %vm149 = vcmask 1040384
    %v150 = vsel %vm149, %v139, %v148
    %vm151 = vcmask 1041408
    %v152 = vsel %vm151, %v150, 0.0
    %153 = vst [vmem:[#allocation8] sm:$0xff] %v152
    %v154 = vpack.c.bf16 %v129, %v129
    %v155 = vpack.c.bf16 %v131, %v131
    %156 = vst [vmem:[#allocation7] sm:$0xf] %v154
    %157 = vst [vmem:[#allocation7 + $0x4] sm:$0xf] %v155
    // Predicated region
    $region18: #{tpu_custom_call.1} parent=1 // pred_check
      _
    $region19: #{tpu_custom_call.1} parent=1 // pred_check_branch
      %159 = sbr.rel (0) target = $region21
    $region20: #{tpu_custom_call.1} parent=1 // pred_region
      %161 = vsyncadd [#allocation4], 0
      %s162 = sshll.u32 [#allocation7], 4
      %s163 = int_to_ptr.vmem [resolvable:$true] %s162
      %s164 = sshll.u32 %s2, 4
      %s165 = int_to_ptr.hbm [resolvable:$true] %s164
      %170 = dma.vmem_to_hbm [thread:$0]  %s163, 128, %s165, [#allocation4], 64, 64, 4
    $region21: #{tpu_custom_call.1} parent=1 // pred_fallthru
      _
    // Predicated region
    $region22: #{tpu_custom_call.1} parent=1 // pred_check
      _
    $region23: #{tpu_custom_call.1} parent=1 // pred_check_branch
      %172 = sbr.rel (0) target = $region25
    $region24: #{tpu_custom_call.1} parent=1 // pred_region
      %174 = vsyncadd [#allocation9], 0
      %s176 = sshll.u32 [#allocation8], 4
      %s177 = int_to_ptr.vmem [resolvable:$true] %s176
      %s178 = sshll.u32 %s3, 4
      %s179 = int_to_ptr.hbm [resolvable:$true] %s178
      %181 = dma.vmem_to_hbm [thread:$0]  %s177, 128, %s179, [#allocation9]
    $region25: #{tpu_custom_call.1} parent=1 // pred_fallthru
      _
    // Predicated region
    $region26: #{tpu_custom_call.1} parent=1 // pred_check
      _
    $region27: #{tpu_custom_call.1} parent=1 // pred_check_branch
      %183 = sbr.rel (0) target = $region29
    $region28: #{tpu_custom_call.1} parent=1 // pred_region
      %185 = dma.done [#allocation4], 128
    $region29: #{tpu_custom_call.1} parent=1 // pred_fallthru
      _
    // Predicated region
    $region30: #{tpu_custom_call.1} parent=1 // pred_check
      _
    $region31: #{tpu_custom_call.1} parent=1 // pred_check_branch
      %187 = sbr.rel (0) target = $region33
    $region32: #{tpu_custom_call.1} parent=1 // pred_region
      %189 = dma.done [#allocation9], 128
    $region33: #{tpu_custom_call.1} parent=1 // pred_fallthru
      _
    %190 = vsyncpa [#allocation3], 1
    %191 = vsyncpa [#allocation6], 1
    %192 = vsyncpa [#allocation4], 1
    %193 = vsyncpa [#allocation9], 1

// kernel: tpu_custom_call.1
$region0: #{tpu_custom_call.1}
  #allocation0 [shape = 'u32[]', space=smem, size = 0x4, offset = 0x4, fixed_abs, tag = 'smem constant byte address 0x4 - core index']
  #allocation1 [shape = 'u32[72,128]{1,0:T(1,128)}', space=vmem, size = 0x9000, scoped, tag = 'internal scratch']
  %s0 = inlined_call_operand.hbm [shape: bf16[16,128], index: 0, kind: input, shape index: {}]
  %s1 = inlined_call_operand.hbm [shape: bf16[128,128], index: 1, kind: input, shape index: {}]
  %s2 = inlined_call_operand.hbm [shape: bf16[16,128], index: 2, kind: output, shape index: {0}]
  %s3 = inlined_call_operand.hbm [shape: f32[8,128], index: 3, kind: output, shape index: {1}]
  %4 = xla_tuple %s2, %s3
  %s5 = sld [smem:[#allocation0]]
  $region34: #{tpu_custom_call.1} parent=0
    _
  %s7 = ssub.s32 1, %s5
  %s8 = scalar_select 0, %s7, %s5
  $region1: #{tpu_custom_call.1} parent=0
    #allocation2 [shape = 'u8[4096]{0}', space=vmem, size = 0x1000, scoped, tag = 'input window, operand 0, single buffered']
    #allocation3 [shape = 's32[1]{0}', space=sflag, size = 0x4, scoped, tag = 'scoped memory for tpu_custom_call.1']
    #allocation4 [shape = 's32[1]{0}', space=sflag, size = 0x4, scoped, tag = 'scoped memory for tpu_custom_call.1']
    #allocation5 [shape = 'u8[32768]{0}', space=vmem, size = 0x8000, scoped, tag = 'input window, operand 1, single buffered']
    #allocation6 [shape = 's32[1]{0}', space=sflag, size = 0x4, scoped, tag = 'scoped memory for tpu_custom_call.1']
    #allocation7 [shape = 'u8[4096]{0}', space=vmem, size = 0x1000, scoped, tag = 'output window, operand 0, single buffered']
    #allocation8 [shape = 'u8[4096]{0}', space=vmem, size = 0x1000, scoped, tag = 'output window, operand 1, single buffered']
    #allocation9 [shape = 's32[1]{0}', space=sflag, size = 0x4, scoped, tag = 'scoped memory for tpu_custom_call.1']
    %9 = vsyncpa [#allocation3], 0
    %10 = vsyncpa [#allocation6], 0
    %11 = vsyncpa [#allocation4], 0
    %12 = vsyncpa [#allocation9], 0
    // Predicated region
    $region2: #{tpu_custom_call.1} parent=1 // pred_check
      _
    $region3: #{tpu_custom_call.1} parent=1 // pred_check_branch
      %14 = sbr.rel (0) target = $region5
    $region4: #{tpu_custom_call.1} parent=1 // pred_region
      %16 = vsyncadd [#allocation3], 0
      %s17 = sshll.u32 %s0, 4
      %s18 = int_to_ptr.hbm [resolvable:$true] %s17
      %s19 = sshll.u32 [#allocation2], 4
      %s20 = int_to_ptr.vmem [resolvable:$true] %s19
      %25 = dma.hbm_to_vmem [thread:$0]  %s18, 128, %s20, [#allocation3], 64, 64, 4
    $region5: #{tpu_custom_call.1} parent=1 // pred_fallthru
      _
    // Predicated region
    $region6: #{tpu_custom_call.1} parent=1 // pred_check
      _
    $region7: #{tpu_custom_call.1} parent=1 // pred_check_branch
      %27 = sbr.rel (0) target = $region9
    $region8: #{tpu_custom_call.1} parent=1 // pred_region
      %29 = vsyncadd [#allocation6], 0
      %s30 = sshll.u32 %s1, 4
      %s31 = int_to_ptr.hbm [resolvable:$true] %s30
      %s32 = sshll.u32 [#allocation5], 4
      %s33 = int_to_ptr.vmem [resolvable:$true] %s32
      %38 = dma.hbm_to_vmem [thread:$0]  %s31, 1024, %s33, [#allocation6], 64, 64, 4
    $region9: #{tpu_custom_call.1} parent=1 // pred_fallthru
      _
    // Predicated region
    $region10: #{tpu_custom_call.1} parent=1 // pred_check
      _
    $region11: #{tpu_custom_call.1} parent=1 // pred_check_branch
      %40 = sbr.rel (0) target = $region13
    $region12: #{tpu_custom_call.1} parent=1 // pred_region
      %42 = dma.done [#allocation3], 128
    $region13: #{tpu_custom_call.1} parent=1 // pred_fallthru
      _
    // Predicated region
    $region14: #{tpu_custom_call.1} parent=1 // pred_check
      _
    $region15: #{tpu_custom_call.1} parent=1 // pred_check_branch
      %44 = sbr.rel (0) target = $region17
    $region16: #{tpu_custom_call.1} parent=1 // pred_region
      %46 = dma.done [#allocation6], 1024
    $region17: #{tpu_custom_call.1} parent=1 // pred_fallthru
      _
    %v47 = vld [vmem:[#allocation2] sm:$0xf]
    %v48 = vld [vmem:[#allocation2 + $0x4] sm:$0xf]
    %v49 = vld [vmem:[#allocation5] sm:$0xf]
    %v50 = vld [vmem:[#allocation5 + $0x4] sm:$0xf]
    %v51 = vld [vmem:[#allocation5 + $0x8] sm:$0xf]
    %v52 = vld [vmem:[#allocation5 + $0xc] sm:$0xf]
    %v53 = vld [vmem:[#allocation5 + $0x10] sm:$0xf]
    %v54 = vld [vmem:[#allocation5 + $0x14] sm:$0xf]
    %v55 = vld [vmem:[#allocation5 + $0x18] sm:$0xf]
    %v56 = vld [vmem:[#allocation5 + $0x1c] sm:$0xf]
    %v57 = vld [vmem:[#allocation5 + $0x20] sm:$0xf]
    %v58 = vld [vmem:[#allocation5 + $0x24] sm:$0xf]
    %v59 = vld [vmem:[#allocation5 + $0x28] sm:$0xf]
    %v60 = vld [vmem:[#allocation5 + $0x2c] sm:$0xf]
    %v61 = vld [vmem:[#allocation5 + $0x30] sm:$0xf]
    %v62 = vld [vmem:[#allocation5 + $0x34] sm:$0xf]
    %v63 = vld [vmem:[#allocation5 + $0x38] sm:$0xf]
    %v64 = vld [vmem:[#allocation5 + $0x3c] sm:$0xf]
    %v67 = vunpack.c.l.b16 %v47
    %v68 = vunpack.c.l.b16 %v48
    %v69 = vpack.c.b16 %v68, %v67
    %v87 = vunpack.c.l.b16 %v49
    %v88 = vunpack.c.l.b16 %v50
    %v89 = vunpack.c.l.b16 %v51
    %v90 = vunpack.c.l.b16 %v52
    %v91 = vunpack.c.l.b16 %v53
    %v92 = vunpack.c.l.b16 %v54
    %v93 = vunpack.c.l.b16 %v55
    %v94 = vunpack.c.l.b16 %v56
    %v95 = vunpack.c.l.b16 %v57
    %v96 = vunpack.c.l.b16 %v58
    %v97 = vunpack.c.l.b16 %v59
    %v98 = vunpack.c.l.b16 %v60
    %v99 = vunpack.c.l.b16 %v61
    %v100 = vunpack.c.l.b16 %v62
    %v101 = vunpack.c.l.b16 %v63
    %v102 = vunpack.c.l.b16 %v64
    %v103 = vpack.c.b16 %v88, %v87
    %v104 = vpack.c.b16 %v90, %v89
    %v105 = vpack.c.b16 %v92, %v91
    %v106 = vpack.c.b16 %v94, %v93
    %v107 = vpack.c.b16 %v96, %v95
    %v108 = vpack.c.b16 %v98, %v97
    %v109 = vpack.c.b16 %v100, %v99
    %v110 = vpack.c.b16 %v102, %v101
    %119 = vmatpush.bf16.msra.mxu0 %v110
    %120 = vmatpush.bf16.msra.mxu0 %v109
    %121 = vmatpush.bf16.msra.mxu0 %v108
    %122 = vmatpush.bf16.msra.mxu0 %v107
    %123 = vmatpush.bf16.msra.mxu0 %v106
    %124 = vmatpush.bf16.msra.mxu0 %v105
    %125 = vmatpush.bf16.msra.mxu0 %v104
    %126 = vmatpush.bf16.msra.mxu0 %v103
    %127 = vmatmul.bf16.gmra.mxu0 %v69
    %v128 = vpop.f32.mrf.mxu0
    %v129 = vadd.f32 0.0, %v128
    %v130 = vpop.f32.mrf.mxu0
    %v131 = vadd.f32 0.0, %v130
    %132 = vdwg.mxu0
    %v133 = vadd.f32 %v129, %v131
    %v134 = vrot.slane %v133, 4
    %v135 = vadd.f32 %v133, %v134
    %v136 = vrot.slane %v135, 2
    %v137 = vadd.f32 %v135, %v136
    %v138 = vrot.slane %v137, 1
    %v139 = vadd.f32 %v137, %v138
    %v140 = vmul.f32 %v129, %v129
    %v141 = vmul.f32 %v131, %v131
    %v142 = vadd.f32 %v140, %v141
    %v143 = vrot.slane %v142, 4
    %v144 = vadd.f32 %v142, %v143
    %v145 = vrot.slane %v144, 2
    %v146 = vadd.f32 %v144, %v145
    %v147 = vrot.slane %v146, 1
    %v148 = vadd.f32 %v146, %v147
    %vm149 = vcmask 1040384
    %v150 = vsel %vm149, %v139, %v148
    %vm151 = vcmask 1041408
    %v152 = vsel %vm151, %v150, 0.0
    %153 = vst [vmem:[#allocation8] sm:$0xff] %v152
    %v154 = vpack.c.bf16 %v129, %v129
    %v155 = vpack.c.bf16 %v131, %v131
    %156 = vst [vmem:[#allocation7] sm:$0xf] %v154
    %157 = vst [vmem:[#allocation7 + $0x4] sm:$0xf] %v155
    // Predicated region
    $region18: #{tpu_custom_call.1} parent=1 // pred_check
      _
    $region19: #{tpu_custom_call.1} parent=1 // pred_check_branch
      %159 = sbr.rel (0) target = $region21
    $region20: #{tpu_custom_call.1} parent=1 // pred_region
      %161 = vsyncadd [#allocation4], 0
      %s162 = sshll.u32 [#allocation7], 4
      %s163 = int_to_ptr.vmem [resolvable:$true] %s162
      %s164 = sshll.u32 %s2, 4
      %s165 = int_to_ptr.hbm [resolvable:$true] %s164
      %170 = dma.vmem_to_hbm [thread:$0]  %s163, 128, %s165, [#allocation4], 64, 64, 4
    $region21: #{tpu_custom_call.1} parent=1 // pred_fallthru
      _
    // Predicated region
    $region22: #{tpu_custom_call.1} parent=1 // pred_check
      _
    $region23: #{tpu_custom_call.1} parent=1 // pred_check_branch
      %172 = sbr.rel (0) target = $region25
    $region24: #{tpu_custom_call.1} parent=1 // pred_region
      %174 = vsyncadd [#allocation9], 0
      %s176 = sshll.u32 [#allocation8], 4
      %s177 = int_to_ptr.vmem [resolvable:$true] %s176
      %s178 = sshll.u32 %s3, 4
      %s179 = int_to_ptr.hbm [resolvable:$true] %s178
      %181 = dma.vmem_to_hbm [thread:$0]  %s177, 128, %s179, [#allocation9]
    $region25: #{tpu_custom_call.1} parent=1 // pred_fallthru
      _
    // Predicated region
    $region26: #{tpu_custom_call.1} parent=1 // pred_check
      _
    $region27: #{tpu_custom_call.1} parent=1 // pred_check_branch
      %183 = sbr.rel (0) target = $region29
    $region28: #{tpu_custom_call.1} parent=1 // pred_region
      %185 = dma.done [#allocation4], 128
    $region29: #{tpu_custom_call.1} parent=1 // pred_fallthru
      _
    // Predicated region
    $region30: #{tpu_custom_call.1} parent=1 // pred_check
      _
    $region31: #{tpu_custom_call.1} parent=1 // pred_check_branch
      %187 = sbr.rel (0) target = $region33
    $region32: #{tpu_custom_call.1} parent=1 // pred_region
      %189 = dma.done [#allocation9], 128
    $region33: #{tpu_custom_call.1} parent=1 // pred_fallthru
      _
    %190 = vsyncpa [#allocation3], 1
    %191 = vsyncpa [#allocation6], 1
    %192 = vsyncpa [#allocation4], 1
    %193 = vsyncpa [#allocation9], 1

</llo_original>
